<compile_context>
chip_gen: v7x
topology: tpu7x:2x2x1
jax: 0.10.0
libtpu: 0.0.40
codegen_flags: <defaults>
</compile_context>

<pallas_src>
import functools

import jax
import jax.numpy as jnp
from jax import lax
from jax.experimental import pallas as pl
from jax.experimental.pallas import tpu as pltpu

# FeatureEncoder class attributes (fixed in the torch module). If a variant makes these
# configurable, pass the precomputed ratio to the wrappers instead of relying on this.
START_TIME = 0.0
END_TIME = 1.0
INV_TIME_SPAN = 1.0 / (END_TIME - START_TIME)   # precomputed: no in-kernel divide

LANE = 128
SUBLANE = 8
MAX_BATCH_TILE = 1024   # rows; ~2 MiB of x + dx tiles (double-buffered) -> v7x-safe


def _round_up(x, m):
    return (x + m - 1) // m * m


def _pick_batch_tile(bp, max_tile=MAX_BATCH_TILE):
    """Largest batch tile <= max_tile that divides bp (bp is a multiple of 8)."""
    if bp <= max_tile:
        return bp
    t = max_tile - (max_tile % SUBLANE)
    while t > SUBLANE and bp % t != 0:
        t -= SUBLANE
    return t


def default_matmul_dtype():
    """bf16 on v6e/v7x (native MXU operand dtype), f32 on v5e (no bf16 VPU/EUP)."""
    try:
        kind = jax.devices()[0].device_kind.lower()
    except Exception:
        return jnp.float32
    return jnp.bfloat16 if ("v6" in kind or "v7" in kind) else jnp.float32


# ---------------------------------------------------------------------------
# Kernel bodies
# ---------------------------------------------------------------------------
def _gru_ode_core(x, w_rz_ref, w_n_ref, hp):
    """Returns (1-z, g) on a padded (bt, Hp) tile.

    w_rz has its W_hz^T half negated at prep time, so the second half of the fused
    sigmoid IS 1-z.  Matmul operands are cast to the (possibly bf16) weight dtype;
    accumulation stays f32 via preferred_element_type; elementwise stays f32.
    """
    mm_dtype = w_rz_ref.dtype
    rz = jax.nn.sigmoid(
        jnp.dot(x.astype(mm_dtype), w_rz_ref[...], preferred_element_type=jnp.float32))
    r = rz[:, :hp]
    zbar = rz[:, hp:]                                   # == 1 - z
    g = jnp.tanh(
        jnp.dot((r * x).astype(mm_dtype), w_n_ref[...], preferred_element_type=jnp.float32))
    return zbar, g


def _forward_kernel(ratio_ref, x_ref, w_rz_ref, w_n_ref, dx_ref):
    hp = x_ref.shape[-1]
    x = x_ref[...]
    zbar, g = _gru_ode_core(x, w_rz_ref, w_n_ref, hp)
    dx_ref[...] = (zbar * (g - x) * ratio_ref[...]).astype(dx_ref.dtype)


def _integrate_euler_kernel(sr_ref, x_ref, w_rz_ref, w_n_ref, h_ref, *, n_steps, unroll):
    bt, hp = x_ref.shape
    # Broadcast ratio*step_size to full tile width ONCE (outside the unrolled loop).
    sr = jnp.broadcast_to(sr_ref[...], (bt, hp))

    def body(_, x):
        zbar, g = _gru_ode_core(x, w_rz_ref, w_n_ref, hp)
        return x + sr * (zbar * (g - x))

    h = lax.fori_loop(0, n_steps, body, x_ref[...], unroll=unroll)
    h_ref[...] = h.astype(h_ref.dtype)


# ---------------------------------------------------------------------------
# One-time parameter / state preparation (do OUTSIDE the odeint step loop)
# ---------------------------------------------------------------------------
def prepare_feature_encoder_params(w_hr, w_hz, w_hn, *, hidden_pad=LANE, matmul_dtype=None):
    """Transpose PyTorch (out,in) Linear weights once, fuse W_hr | -W_hz along the output
    dim (so the fused sigmoid yields r and 1-z directly), and zero-pad to `hidden_pad`
    lanes.  matmul_dtype=None -> bf16 on v6e/v7x, f32 on v5e."""
    if matmul_dtype is None:
        matmul_dtype = default_matmul_dtype()
    h = w_hr.shape[0]
    hp = max(hidden_pad, _round_up(h, LANE))

    def pad(wt):  # (H, H) already transposed to (in, out) -> (Hp, Hp)
        return jnp.zeros((hp, hp), jnp.float32).at[:h, :h].set(wt.astype(jnp.float32))

    w_rz = jnp.concatenate([pad(w_hr.T), pad(-w_hz.T)], axis=1)     # (Hp, 2*Hp)
    w_n = pad(w_hn.T)                                               # (Hp, Hp)
    return w_rz.astype(matmul_dtype), w_n.astype(matmul_dtype)


def pad_state(t0, t1, x, *, hidden_pad=LANE):
    """Zero-pad the ODE state once before the solver loop; keep it padded throughout.
    Padded rows have t0=t1=0 -> ratio=0 -> they stay constant under integration.
    NOTE: batch many independent walks/states together before calling this — Bp >= 256
    rows is needed to actually fill the MXU on v6e/v7x (>=128 on v5e)."""
    b, h = x.shape
    bp = _round_up(max(b, SUBLANE), SUBLANE)
    hp = max(hidden_pad, _round_up(h, LANE))
    xp = jnp.zeros((bp, hp), x.dtype).at[:b, :h].set(x)
    t0p = jnp.zeros((bp, 1), t0.dtype).at[:b].set(t0)
    t1p = jnp.zeros((bp, 1), t1.dtype).at[:b].set(t1)
    return t0p, t1p, xp


def _grid_spec(bp, hp, bt, w_rz_shape, w_n_shape):
    return pltpu.PrefetchScalarGridSpec(
        num_scalar_prefetch=0,
        grid=(bp // bt,),
        in_specs=[pl.BlockSpec((bt, 1), lambda i: (i, 0)),          # ratio / ratio*dt
                  pl.BlockSpec((bt, hp), lambda i: (i, 0)),         # x
                  pl.BlockSpec(w_rz_shape, lambda i: (0, 0)),       # weights: constant
                  pl.BlockSpec(w_n_shape, lambda i: (0, 0))],       #   index_map, no re-DMA
        out_specs=pl.BlockSpec((bt, hp), lambda i: (i, 0)),
    )


# ---------------------------------------------------------------------------
# Public wrappers
# ---------------------------------------------------------------------------
@jax.jit
def feature_encoder_forward(s, t0, t1, x, w_rz, w_n):
    """Per-step ODE function == FeatureEncoder.forward, on PADDED state from pad_state()
    with fused/padded weights from prepare_feature_encoder_params().

    `s` is accepted for API parity but never reaches the kernel: the torch module
    computes t from it and GRUODECell ignores t (dead code).
    If called repeatedly from an external odeint loop, prefer the fused
    feature_encoder_integrate_euler path (per-call launch + weight DMA dominates here).
    """
    del s
    bp, hp = x.shape
    ratio = (t1 - t0) * INV_TIME_SPAN                    # (Bp,1) computed wrapper-side
    bt = _pick_batch_tile(bp)
    dx = pl.pallas_call(
        _forward_kernel,
        out_shape=jax.ShapeDtypeStruct((bp, hp), x.dtype),
        grid_spec=_grid_spec(bp, hp, bt, w_rz.shape, w_n.shape),
        compiler_params=pltpu.CompilerParams(dimension_semantics=("parallel",)),
    )(ratio, x, w_rz, w_n)
    # Constant-zero derivatives for (t0, t1): emitted here (constant-folded by XLA)
    # instead of burning two narrow masked-store kernel outputs.
    return jnp.zeros_like(t0), jnp.zeros_like(t1), dx


@functools.partial(jax.jit, static_argnames=("n_steps", "step_size"))
def feature_encoder_integrate_euler(t0, t1, x, w_rz, w_n, *, n_steps, step_size):
    """Fused fixed-step (euler) solve of the GRU-ODE over [start_time, end_time] in a
    single pallas_call: weights are DMA'd into VMEM once per batch tile and the hidden
    state is carried across all steps; x is aliased to the output h."""
    bp, hp = x.shape
    # ratio * step_size, precomputed once in the wrapper (loop-invariant).
    sr = (t1 - t0) * (INV_TIME_SPAN * float(step_size))            # (Bp,1)
    bt = _pick_batch_tile(bp)
    # Bound the unroll: full unroll only while the per-step temporaries (rz is bt x 2Hp
    # f32 = bt vregs at Hp=128) stay well inside the 64-vreg file.
    unroll = int(n_steps) if bt <= 64 else 2
    kernel = functools.partial(_integrate_euler_kernel,
                               n_steps=int(n_steps), unroll=unroll)
    return pl.pallas_call(
        kernel,
        out_shape=jax.ShapeDtypeStruct((bp, hp), x.dtype),
        grid_spec=_grid_spec(bp, hp, bt, w_rz.shape, w_n.shape),
        input_output_aliases={1: 0},                     # x  <->  h (same shape/dtype)
        compiler_params=pltpu.CompilerParams(dimension_semantics=("parallel",)),
    )(sr, x, w_rz, w_n)


# ---------------------------------------------------------------------------
# Pure-JAX references (mirror the torch code) for correctness checks
# ---------------------------------------------------------------------------
def _reference_forward(t0, t1, x, w_hr, w_hz, w_hn):
    ratio = (t1 - t0) / (END_TIME - START_TIME)
    r = jax.nn.sigmoid(x @ w_hr.T)
    z = jax.nn.sigmoid(x @ w_hz.T)
    g = jnp.tanh((r * x) @ w_hn.T)
    dx = (1.0 - z) * (g - x) * ratio
    return jnp.zeros_like(t0), jnp.zeros_like(t1), dx


def _reference_euler(t0, t1, x, w_hr, w_hz, w_hn, n_steps, step_size):
    h = x
    for _ in range(n_steps):
        _, _, dx = _reference_forward(t0, t1, h, w_hr, w_hz, w_hn)
        h = h + step_size * dx
    return h


if __name__ == "__main__":
    # Small shapes consistent with the module: batch=2, n_walk=4 -> B=8 rows,
    # hidden_features=32 (padded to 128 lanes inside the kernel path).
    batch, n_walk, hidden = 2, 4, 32
    B = batch * n_walk

    key = jax.random.PRNGKey(0)
    k_x, k_t1, k_r, k_z, k_n = jax.random.split(key, 5)

    x = jax.random.normal(k_x, (B, hidden), dtype=jnp.float32)
    t0 = jnp.zeros((B, 1), dtype=jnp.float32)
    # delta_t-like values, as produced by FeatureEncoder.integrate.
    t1 = (jnp.log10(jnp.abs(jax.random.normal(k_t1, (B, 1))) + 1.0) + 0.01).astype(jnp.float32)
    s = jnp.float32(0.5)

    bound = 1.0 / (hidden ** 0.5)
    w_hr = jax.random.uniform(k_r, (hidden, hidden), jnp.float32, -bound, bound)
    w_hz = jax.random.uniform(k_z, (hidden, hidden), jnp.float32, -bound, bound)
    w_hn = jax.random.uniform(k_n, (hidden, hidden), jnp.float32, -bound, bound)

    # One-time prep (outside any step loop): transpose + fuse r/(1-z) + lane-pad weights,
    # and pad the ODE state to (Bp, 128).  f32 weights for the tight-tolerance checks.
    w_rz, w_n = prepare_feature_encoder_params(w_hr, w_hz, w_hn, matmul_dtype=jnp.float32)
    t0_p, t1_p, x_p = pad_state(t0, t1, x)

    # --- single ODE-function evaluation (FeatureEncoder.forward) ---
    dt0, dt1, dx_p = jax.block_until_ready(
        feature_encoder_forward(s, t0_p, t1_p, x_p, w_rz, w_n))
    dx = dx_p[:B, :hidden]

    r0, r1, rdx = _reference_forward(t0, t1, x, w_hr, w_hz, w_hn)
    assert dx.shape == rdx.shape and dx.dtype == rdx.dtype
    assert jnp.allclose(dx, rdx, atol=1e-5, rtol=1e-5)
    assert (not jnp.any(dt0)) and (not jnp.any(dt1))

    # --- fused fixed-step solve (weights + state resident across all steps) ---
    n_steps, step_size = 8, 0.125
    h_p = jax.block_until_ready(
        feature_encoder_integrate_euler(t0_p, t1_p, x_p, w_rz, w_n,
                                        n_steps=n_steps, step_size=step_size))
    h = h_p[:B, :hidden]
    h_ref = _reference_euler(t0, t1, x, w_hr, w_hz, w_hn, n_steps, step_size)
    assert jnp.allclose(h, h_ref, atol=1e-4, rtol=1e-4)

    # --- default matmul dtype path (bf16 on v6e/v7x, f32 on v5e), loose tolerance ---
    w_rz_d, w_n_d = prepare_feature_encoder_params(w_hr, w_hz, w_hn)   # auto dtype
    _, _, dx_p_d = jax.block_until_ready(
        feature_encoder_forward(s, t0_p, t1_p, x_p, w_rz_d, w_n_d))
    assert jnp.allclose(dx_p_d[:B, :hidden], rdx, atol=2e-2, rtol=2e-2)

    # TODO(synk): torchdiffeq's rk4 (3/8-rule) / dopri5 drivers and the GRU/LSTM/Mamba/
    # Transformer branches of FeatureEncoder.integrate are orchestration outside
    # forward(); only forward() and a fused fixed-step (euler) solve are implemented.
    print("KERNEL_OK")
</pallas_src>

<mosaic_0001>
module attributes {stable_mosaic.version = 11 : i64} {
  func.func @_forward_kernel(%arg0: i32, %arg1: memref<8x1xf32, #tpu.memory_space<vmem>>, %arg2: memref<8x128xf32, #tpu.memory_space<vmem>>, %arg3: memref<128x256xf32, #tpu.memory_space<vmem>>, %arg4: memref<128x128xf32, #tpu.memory_space<vmem>>, %arg5: memref<8x128xf32, #tpu.memory_space<vmem>>) attributes {dimension_semantics = [#tpu.dimension_semantics<parallel>], iteration_bounds = array<i64: 1>, scalar_prefetch = 0 : i64, scratch_operands = 0 : i64, tpu.core_type = #tpu.core_type<tc>, window_params = [{transform_indices = @transform_0, window_bounds = array<i64: 8, 1>}, {transform_indices = @transform_1, window_bounds = array<i64: 8, 128>}, {pipeline_mode = #tpu.pipeline_mode<synchronous>, transform_indices = @transform_2, window_bounds = array<i64: 128, 256>}, {pipeline_mode = #tpu.pipeline_mode<synchronous>, transform_indices = @transform_3, window_bounds = array<i64: 128, 128>}, {transform_indices = @transform_4, window_bounds = array<i64: 8, 128>}]} {
    %c0 = arith.constant 0 : index
    %c0_0 = arith.constant 0 : index
    %0 = vector.load %arg2[%c0, %c0_0] : memref<8x128xf32, #tpu.memory_space<vmem>>, vector<8x128xf32>
    %c0_1 = arith.constant 0 : index
    %c0_2 = arith.constant 0 : index
    %1 = vector.load %arg3[%c0_1, %c0_2] : memref<128x256xf32, #tpu.memory_space<vmem>>, vector<128x256xf32>
    %cst = arith.constant dense<0.000000e+00> : vector<8x256xf32>
    %2 = tpu.matmul %0, %1, %cst {dimension_numbers = #tpu.dot_dimension_numbers<[1], [0], [0], [1], [0, 0, 1, 1], [], []>} : vector<8x128xf32>, vector<128x256xf32>, vector<8x256xf32> -> vector<8x256xf32>
    %3 = arith.negf %2 : vector<8x256xf32>
    %4 = math.exp %3 : vector<8x256xf32>
    %cst_3 = arith.constant 1.000000e+00 : f32
    %5 = vector.broadcast %cst_3 : f32 to vector<8x256xf32>
    %6 = arith.addf %5, %4 : vector<8x256xf32>
    %7 = arith.divf %5, %6 : vector<8x256xf32>
    %8 = vector.extract_strided_slice %7 {offsets = [0, 0], sizes = [8, 128], strides = [1, 1]} : vector<8x256xf32> to vector<8x128xf32>
    %9 = vector.extract_strided_slice %7 {offsets = [0, 128], sizes = [8, 128], strides = [1, 1]} : vector<8x256xf32> to vector<8x128xf32>
    %10 = arith.mulf %8, %0 : vector<8x128xf32>
    %c0_4 = arith.constant 0 : index
    %c0_5 = arith.constant 0 : index
    %11 = vector.load %arg4[%c0_4, %c0_5] : memref<128x128xf32, #tpu.memory_space<vmem>>, vector<128x128xf32>
    %cst_6 = arith.constant dense<0.000000e+00> : vector<8x128xf32>
    %12 = tpu.matmul %10, %11, %cst_6 {dimension_numbers = #tpu.dot_dimension_numbers<[1], [0], [0], [1], [0, 0, 1, 1], [], []>} : vector<8x128xf32>, vector<128x128xf32>, vector<8x128xf32> -> vector<8x128xf32>
    %13 = math.tanh %12 : vector<8x128xf32>
    %14 = arith.subf %13, %0 : vector<8x128xf32>
    %15 = arith.mulf %9, %14 : vector<8x128xf32>
    %c0_7 = arith.constant 0 : index
    %c0_8 = arith.constant 0 : index
    %16 = vector.load %arg1[%c0_7, %c0_8] : memref<8x1xf32, #tpu.memory_space<vmem>>, vector<8x1xf32>
    %17 = vector.broadcast %16 : vector<8x1xf32> to vector<8x128xf32>
    %18 = arith.mulf %15, %17 : vector<8x128xf32>
    %c0_9 = arith.constant 0 : index
    %c0_10 = arith.constant 0 : index
    %19 = vector.load %arg5[%c0_9, %c0_10] : memref<8x128xf32, #tpu.memory_space<vmem>>, vector<8x128xf32>
    tpu.vector_store %arg5[%c0_9, %c0_10], %18 {strides = array<i32>} : memref<8x128xf32, #tpu.memory_space<vmem>>, vector<8x128xf32>,
    return
  }
  func.func @transform_0(%arg0: i32) -> (i32, i32) {
    %c0_i32 = arith.constant 0 : i32
    %c0_i32_0 = arith.constant 0 : i32
    return %arg0, %c0_i32 : i32, i32
  }
  func.func @transform_1(%arg0: i32) -> (i32, i32) {
    %c0_i32 = arith.constant 0 : i32
    %c0_i32_0 = arith.constant 0 : i32
    return %arg0, %c0_i32 : i32, i32
  }
  func.func @transform_2(%arg0: i32) -> (i32, i32) {
    %c0_i32 = arith.constant 0 : i32
    %c0_i32_0 = arith.constant 0 : i32
    %c0_i32_1 = arith.constant 0 : i32
    return %c0_i32, %c0_i32_0 : i32, i32
  }
  func.func @transform_3(%arg0: i32) -> (i32, i32) {
    %c0_i32 = arith.constant 0 : i32
    %c0_i32_0 = arith.constant 0 : i32
    %c0_i32_1 = arith.constant 0 : i32
    return %c0_i32, %c0_i32_0 : i32, i32
  }
  func.func @transform_4(%arg0: i32) -> (i32, i32) {
    %c0_i32 = arith.constant 0 : i32
    %c0_i32_0 = arith.constant 0 : i32
    return %arg0, %c0_i32 : i32, i32
  }
}

</mosaic_0001>

<llo_original>
// kernel: sub.1
$region0: #{sub.1}
  #allocation0 [shape = 's32[1]{0}', space=sflag, size = 0x4, scoped, tag = 'scoped memory for sub.1']
  %s0 = inlined_call_operand.vmem [shape: f32[8,1], index: 0, kind: input, shape index: {}]
  %s1 = inlined_call_operand.vmem [shape: f32[8,1], index: 1, kind: input, shape index: {}]
  %s2 = inlined_call_operand.vmem [shape: f32[8,1], index: 2, kind: output, shape index: {}]
  %v3 = vld [vmem:[%s0] sm:$0xff]
  %v4 = vld [vmem:[%s1] sm:$0xff]
  %5 = xla_tuple %v3, %v4
  %6 = xla_tuple %5
  %v7 = vsub.f32 %v3, %v4
  %8 = xla_tuple %v7
  %9 = vst [vmem:[%s2] sm:$0xff] %v7

// kernel: feature_encoder_forward.1
$region0: #{feature_encoder_forward.1}
  #allocation0 [shape = 'u32[]', space=smem, size = 0x4, offset = 0x4, fixed_abs, tag = 'smem constant byte address 0x4 - core index']
  #allocation1 [shape = 'u32[144,128]{1,0:T(1,128)}', space=vmem, size = 0x12000, scoped, tag = 'internal scratch']
  %s0 = inlined_call_operand.vmem [shape: f32[8,1], index: 0, kind: input, shape index: {}]
  %s1 = inlined_call_operand.vmem [shape: f32[8,128], index: 1, kind: input, shape index: {}]
  %s2 = inlined_call_operand.hbm [shape: f32[128,256], index: 2, kind: input, shape index: {}]
  %s3 = inlined_call_operand.hbm [shape: f32[128,128], index: 3, kind: input, shape index: {}]
  %s4 = inlined_call_operand.hbm [shape: f32[8,128], index: 4, kind: output, shape index: {}]
  %s5 = sld [smem:[#allocation0]]
  $region34: #{feature_encoder_forward.1} parent=0
    _
  %s7 = ssub.s32 1, %s5
  %s8 = scalar_select 0, %s7, %s5
  $region1: #{feature_encoder_forward.1} parent=0
    #allocation2 [shape = 'u8[131072]{0}', space=vmem, size = 0x20000, scoped, tag = 'input window, operand 2, single buffered']
    #allocation3 [shape = 's32[1]{0}', space=sflag, size = 0x4, scoped, tag = 'scoped memory for feature_encoder_forward.1']
    #allocation4 [shape = 's32[1]{0}', space=sflag, size = 0x4, scoped, tag = 'scoped memory for feature_encoder_forward.1']
    #allocation5 [shape = 'u8[65536]{0}', space=vmem, size = 0x10000, scoped, tag = 'input window, operand 3, single buffered']
    #allocation6 [shape = 's32[1]{0}', space=sflag, size = 0x4, scoped, tag = 'scoped memory for feature_encoder_forward.1']
    #allocation7 [shape = 'u8[4096]{0}', space=vmem, size = 0x1000, scoped, tag = 'output window, operand 0, single buffered']
    %9 = vsyncpa [#allocation3], 0
    %10 = vsyncpa [#allocation6], 0
    %11 = vsyncpa [#allocation4], 0
    // Predicated region
    $region2: #{feature_encoder_forward.1} parent=1 // pred_check
      _
    $region3: #{feature_encoder_forward.1} parent=1 // pred_check_branch
      %13 = sbr.rel (0) target = $region5
    $region4: #{feature_encoder_forward.1} parent=1 // pred_region
      _
    $region5: #{feature_encoder_forward.1} parent=1 // pred_fallthru
      _
    // Predicated region
    $region6: #{feature_encoder_forward.1} parent=1 // pred_check
      _
    $region7: #{feature_encoder_forward.1} parent=1 // pred_check_branch
      %15 = sbr.rel (0) target = $region9
    $region8: #{feature_encoder_forward.1} parent=1 // pred_region
      _
    $region9: #{feature_encoder_forward.1} parent=1 // pred_fallthru
      _
    // Predicated region
    $region10: #{feature_encoder_forward.1} parent=1 // pred_check
      _
    $region11: #{feature_encoder_forward.1} parent=1 // pred_check_branch
      %17 = sbr.rel (0) target = $region13
    $region12: #{feature_encoder_forward.1} parent=1 // pred_region
      %s19 = ssub.s32 4096, 4096
      %20 = vsyncadd [#allocation3], %s19
      %s21 = sshll.u32 [#allocation2], 4
      %s22 = int_to_ptr.vmem [resolvable:$true] %s21
      %27 = dma.hbm_to_vmem [thread:$0]  %s2, 4096, %s22, [#allocation3], 256, 256, 16
    $region13: #{feature_encoder_forward.1} parent=1 // pred_fallthru
      _
    // Predicated region
    $region14: #{feature_encoder_forward.1} parent=1 // pred_check
      _
    $region15: #{feature_encoder_forward.1} parent=1 // pred_check_branch
      %29 = sbr.rel (0) target = $region17
    $region16: #{feature_encoder_forward.1} parent=1 // pred_region
      %s31 = ssub.s32 2048, 2048
      %32 = vsyncadd [#allocation6], %s31
      %s33 = sshll.u32 [#allocation5], 4
      %s34 = int_to_ptr.vmem [resolvable:$true] %s33
      %39 = dma.hbm_to_vmem [thread:$0]  %s3, 2048, %s34, [#allocation6], 128, 128, 8
    $region17: #{feature_encoder_forward.1} parent=1 // pred_fallthru
      _
    // Predicated region
    $region18: #{feature_encoder_forward.1} parent=1 // pred_check
      _
    $region19: #{feature_encoder_forward.1} parent=1 // pred_check_branch
      %41 = sbr.rel (0) target = $region21
    $region20: #{feature_encoder_forward.1} parent=1 // pred_region
      %42 = dma.done [#allocation3], 4096
    $region21: #{feature_encoder_forward.1} parent=1 // pred_fallthru
      _
    // Predicated region
    $region22: #{feature_encoder_forward.1} parent=1 // pred_check
      _
    $region23: #{feature_encoder_forward.1} parent=1 // pred_check_branch
      %44 = sbr.rel (0) target = $region25
    $region24: #{feature_encoder_forward.1} parent=1 // pred_region
      %45 = dma.done [#allocation6], 2048
    $region25: #{feature_encoder_forward.1} parent=1 // pred_fallthru
      _
    %v46 = vld [vmem:[%s1] sm:$0xff]
    %v47 = vld [vmem:[#allocation2] sm:$0xff]
    %v48 = vld [vmem:[#allocation2 + $0x8] sm:$0xff]
    %v49 = vld [vmem:[#allocation2 + $0x10] sm:$0xff]
    %v50 = vld [vmem:[#allocation2 + $0x18] sm:$0xff]
    %v51 = vld [vmem:[#allocation2 + $0x20] sm:$0xff]
    %v52 = vld [vmem:[#allocation2 + $0x28] sm:$0xff]
    %v53 = vld [vmem:[#allocation2 + $0x30] sm:$0xff]
    %v54 = vld [vmem:[#allocation2 + $0x38] sm:$0xff]
    %v55 = vld [vmem:[#allocation2 + $0x40] sm:$0xff]
    %v56 = vld [vmem:[#allocation2 + $0x48] sm:$0xff]
    %v57 = vld [vmem:[#allocation2 + $0x50] sm:$0xff]
    %v58 = vld [vmem:[#allocation2 + $0x58] sm:$0xff]
    %v59 = vld [vmem:[#allocation2 + $0x60] sm:$0xff]
    %v60 = vld [vmem:[#allocation2 + $0x68] sm:$0xff]
    %v61 = vld [vmem:[#allocation2 + $0x70] sm:$0xff]
    %v62 = vld [vmem:[#allocation2 + $0x78] sm:$0xff]
    %v63 = vld [vmem:[#allocation2 + $0x80] sm:$0xff]
    %v64 = vld [vmem:[#allocation2 + $0x88] sm:$0xff]
    %v65 = vld [vmem:[#allocation2 + $0x90] sm:$0xff]
    %v66 = vld [vmem:[#allocation2 + $0x98] sm:$0xff]
    %v67 = vld [vmem:[#allocation2 + $0xa0] sm:$0xff]
    %v68 = vld [vmem:[#allocation2 + $0xa8] sm:$0xff]
    %v69 = vld [vmem:[#allocation2 + $0xb0] sm:$0xff]
    %v70 = vld [vmem:[#allocation2 + $0xb8] sm:$0xff]
    %v71 = vld [vmem:[#allocation2 + $0xc0] sm:$0xff]
    %v72 = vld [vmem:[#allocation2 + $0xc8] sm:$0xff]
    %v73 = vld [vmem:[#allocation2 + $0xd0] sm:$0xff]
    %v74 = vld [vmem:[#allocation2 + $0xd8] sm:$0xff]
    %v75 = vld [vmem:[#allocation2 + $0xe0] sm:$0xff]
    %v76 = vld [vmem:[#allocation2 + $0xe8] sm:$0xff]
    %v77 = vld [vmem:[#allocation2 + $0xf0] sm:$0xff]
    %v78 = vld [vmem:[#allocation2 + $0xf8] sm:$0xff]
    %79 = vmatprep.subr.mxu0 %v48
    %80 = vmatpush1.msra.mxu0 %v47
    %81 = vmatprep.subr.mxu0 %v50
    %82 = vmatpush1.msra.mxu0 %v49
    %83 = vmatprep.subr.mxu0 %v52
    %84 = vmatpush1.msra.mxu0 %v51
    %85 = vmatprep.subr.mxu0 %v54
    %86 = vmatpush1.msra.mxu0 %v53
    %87 = vmatprep.subr.mxu0 %v56
    %88 = vmatpush1.msra.mxu0 %v55
    %89 = vmatprep.subr.mxu0 %v58
    %90 = vmatpush1.msra.mxu0 %v57
    %91 = vmatprep.subr.mxu0 %v60
    %92 = vmatpush1.msra.mxu0 %v59
    %93 = vmatprep.subr.mxu0 %v62
    %94 = vmatpush1.msra.mxu0 %v61
    %95 = vmatprep.subr.mxu0 %v64
    %96 = vmatpush1.msra.mxu0 %v63
    %97 = vmatprep.subr.mxu0 %v66
    %98 = vmatpush1.msra.mxu0 %v65
    %99 = vmatprep.subr.mxu0 %v68
    %100 = vmatpush1.msra.mxu0 %v67
    %101 = vmatprep.subr.mxu0 %v70
    %102 = vmatpush1.msra.mxu0 %v69
    %103 = vmatprep.subr.mxu0 %v72
    %104 = vmatpush1.msra.mxu0 %v71
    %105 = vmatprep.subr.mxu0 %v74
    %106 = vmatpush1.msra.mxu0 %v73
    %107 = vmatprep.subr.mxu0 %v76
    %108 = vmatpush1.msra.mxu0 %v75
    %109 = vmatprep.subr.mxu0 %v78
    %110 = vmatpush1.msra.mxu0 %v77
    %111 = vmatprep.subr.mxu0 0.0
    %112 = vmatpush1.msra.mxu0 0.0
    %113 = vmatprep.subr.mxu0 0.0
    %114 = vmatpush1.msra.mxu0 0.0
    %115 = vmatprep.subr.mxu0 0.0
    %116 = vmatpush1.msra.mxu0 0.0
    %117 = vmatprep.subr.mxu0 0.0
    %118 = vmatpush1.msra.mxu0 0.0
    %119 = vmatprep.subr.mxu0 0.0
    %120 = vmatpush1.msra.mxu0 0.0
    %121 = vmatprep.subr.mxu0 0.0
    %122 = vmatpush1.msra.mxu0 0.0
    %123 = vmatprep.subr.mxu0 0.0
    %124 = vmatpush1.msra.mxu0 0.0
    %125 = vmatprep.subr.mxu0 0.0
    %126 = vmatpush1.msra.mxu0 0.0
    %127 = vmatprep.subr.mxu0 0.0
    %128 = vmatpush1.msra.mxu0 0.0
    %129 = vmatprep.subr.mxu0 0.0
    %130 = vmatpush1.msra.mxu0 0.0
    %131 = vmatprep.subr.mxu0 0.0
    %132 = vmatpush1.msra.mxu0 0.0
    %133 = vmatprep.subr.mxu0 0.0
    %134 = vmatpush1.msra.mxu0 0.0
    %135 = vmatprep.subr.mxu0 0.0
    %136 = vmatpush1.msra.mxu0 0.0
    %137 = vmatprep.subr.mxu0 0.0
    %138 = vmatpush1.msra.mxu0 0.0
    %139 = vmatprep.subr.mxu0 0.0
    %140 = vmatpush1.msra.mxu0 0.0
    %141 = vmatprep.subr.mxu0 0.0
    %142 = vmatpush1.msra.mxu0 0.0
    %143 = vmatprep.mubr.f32.mxu0 0.0
    %144 = vmatmul.mubr.f32.gmra.mrb[0].mxu0 %v46
    %v145 = vpop.f32.mrb[0].mxu0
    %v146 = vadd.f32 0.0, %v145
    %v147 = vpop.f32.mrb[0].mxu0
    %v148 = vadd.f32 0.0, %v147
    %149 = vdwg.mxu0
    %v150 = vxor.u32 %v146, 2147483648
    %v151 = vxor.u32 %v148, 2147483648
    %v152 = vmul.f32 %v150, 1.442695
    %v153 = vpow.pop %v152
    %v154 = vmul.f32 %v151, 1.442695
    %v155 = vpow.pop %v154
    %v156 = vadd.f32 %v153, 1.0
    %v157 = vadd.f32 %v155, 1.0
    %v158 = vrcp.pop %v156
    %v159 = vmul.f32 1.0, %v158
    %v160 = vrcp.pop %v157
    %v161 = vmul.f32 1.0, %v160
    %v162 = vmul.f32 %v159, %v46
    %v163 = vld [vmem:[#allocation5] sm:$0xff]
    %v164 = vld [vmem:[#allocation5 + $0x8] sm:$0xff]
    %v165 = vld [vmem:[#allocation5 + $0x10] sm:$0xff]
    %v166 = vld [vmem:[#allocation5 + $0x18] sm:$0xff]
    %v167 = vld [vmem:[#allocation5 + $0x20] sm:$0xff]
    %v168 = vld [vmem:[#allocation5 + $0x28] sm:$0xff]
    %v169 = vld [vmem:[#allocation5 + $0x30] sm:$0xff]
    %v170 = vld [vmem:[#allocation5 + $0x38] sm:$0xff]
    %v171 = vld [vmem:[#allocation5 + $0x40] sm:$0xff]
    %v172 = vld [vmem:[#allocation5 + $0x48] sm:$0xff]
    %v173 = vld [vmem:[#allocation5 + $0x50] sm:$0xff]
    %v174 = vld [vmem:[#allocation5 + $0x58] sm:$0xff]
    %v175 = vld [vmem:[#allocation5 + $0x60] sm:$0xff]
    %v176 = vld [vmem:[#allocation5 + $0x68] sm:$0xff]
    %v177 = vld [vmem:[#allocation5 + $0x70] sm:$0xff]
    %v178 = vld [vmem:[#allocation5 + $0x78] sm:$0xff]
    %179 = vmatprep.subr.mxu0 0.0
    %180 = vmatpush1.msra.mxu0 %v163
    %181 = vmatprep.subr.mxu0 0.0
    %182 = vmatpush1.msra.mxu0 %v164
    %183 = vmatprep.subr.mxu0 0.0
    %184 = vmatpush1.msra.mxu0 %v165
    %185 = vmatprep.subr.mxu0 0.0
    %186 = vmatpush1.msra.mxu0 %v166
    %187 = vmatprep.subr.mxu0 0.0
    %188 = vmatpush1.msra.mxu0 %v167
    %189 = vmatprep.subr.mxu0 0.0
    %190 = vmatpush1.msra.mxu0 %v168
    %191 = vmatprep.subr.mxu0 0.0
    %192 = vmatpush1.msra.mxu0 %v169
    %193 = vmatprep.subr.mxu0 0.0
    %194 = vmatpush1.msra.mxu0 %v170
    %195 = vmatprep.subr.mxu0 0.0
    %196 = vmatpush1.msra.mxu0 %v171
    %197 = vmatprep.subr.mxu0 0.0
    %198 = vmatpush1.msra.mxu0 %v172
    %199 = vmatprep.subr.mxu0 0.0
    %200 = vmatpush1.msra.mxu0 %v173
    %201 = vmatprep.subr.mxu0 0.0
    %202 = vmatpush1.msra.mxu0 %v174
    %203 = vmatprep.subr.mxu0 0.0
    %204 = vmatpush1.msra.mxu0 %v175
    %205 = vmatprep.subr.mxu0 0.0
    %206 = vmatpush1.msra.mxu0 %v176
    %207 = vmatprep.subr.mxu0 0.0
    %208 = vmatpush1.msra.mxu0 %v177
    %209 = vmatprep.subr.mxu0 0.0
    %210 = vmatpush1.msra.mxu0 %v178
    %211 = vmatprep.subr.mxu0 0.0
    %212 = vmatpush1.msra.mxu0 0.0
    %213 = vmatprep.subr.mxu0 0.0
    %214 = vmatpush1.msra.mxu0 0.0
    %215 = vmatprep.subr.mxu0 0.0
    %216 = vmatpush1.msra.mxu0 0.0
    %217 = vmatprep.subr.mxu0 0.0
    %218 = vmatpush1.msra.mxu0 0.0
    %219 = vmatprep.subr.mxu0 0.0
    %220 = vmatpush1.msra.mxu0 0.0
    %221 = vmatprep.subr.mxu0 0.0
    %222 = vmatpush1.msra.mxu0 0.0
    %223 = vmatprep.subr.mxu0 0.0
    %224 = vmatpush1.msra.mxu0 0.0
    %225 = vmatprep.subr.mxu0 0.0
    %226 = vmatpush1.msra.mxu0 0.0
    %227 = vmatprep.subr.mxu0 0.0
    %228 = vmatpush1.msra.mxu0 0.0
    %229 = vmatprep.subr.mxu0 0.0
    %230 = vmatpush1.msra.mxu0 0.0
    %231 = vmatprep.subr.mxu0 0.0
    %232 = vmatpush1.msra.mxu0 0.0
    %233 = vmatprep.subr.mxu0 0.0
    %234 = vmatpush1.msra.mxu0 0.0
    %235 = vmatprep.subr.mxu0 0.0
    %236 = vmatpush1.msra.mxu0 0.0
    %237 = vmatprep.subr.mxu0 0.0
    %238 = vmatpush1.msra.mxu0 0.0
    %239 = vmatprep.subr.mxu0 0.0
    %240 = vmatpush1.msra.mxu0 0.0
    %241 = vmatprep.subr.mxu0 0.0
    %242 = vmatpush1.msra.mxu0 0.0
    %243 = vmatprep.mubr.f32.mxu0 0.0
    %244 = vmatmul.mubr.f32.gmra.mrb[0].mxu0 %v162
    %v245 = vpop.f32.mrb[0].mxu0
    %v246 = vadd.f32 0.0, %v245
    %v247 = vpop.f32.mrb[0].mxu0
    %248 = vdwg.mxu0
    %v249 = vtanh.pop %v246
    %v250 = vsub.f32 %v249, %v46
    %v251 = vmul.f32 %v161, %v250
    %v252 = vld [vmem:[%s0] sm:$0xff]
    %254 = vset.pattern.permute.xlu0 0
    %255 = vperm.xlu0 %254, %v252
    %v256 = vpop.permute.xlu0 %255
    %v258 = vmul.f32 %v251, %v256
    %259 = vst [vmem:[#allocation7] sm:$0xff] %v258
    // Predicated region
    $region26: #{feature_encoder_forward.1} parent=1 // pred_check
      _
    $region27: #{feature_encoder_forward.1} parent=1 // pred_check_branch
      %261 = sbr.rel (0) target = $region29
    $region28: #{feature_encoder_forward.1} parent=1 // pred_region
      %s263 = ssub.s32 128, 128
      %264 = vsyncadd [#allocation4], %s263
      %s266 = sshll.u32 [#allocation7], 4
      %s267 = int_to_ptr.vmem [resolvable:$true] %s266
      %269 = dma.vmem_to_hbm [thread:$0]  %s267, 128, %s4, [#allocation4]
    $region29: #{feature_encoder_forward.1} parent=1 // pred_fallthru
      _
    // Predicated region
    $region30: #{feature_encoder_forward.1} parent=1 // pred_check
      _
    $region31: #{feature_encoder_forward.1} parent=1 // pred_check_branch
      %271 = sbr.rel (0) target = $region33
    $region32: #{feature_encoder_forward.1} parent=1 // pred_region
      %272 = dma.done [#allocation4], 128
    $region33: #{feature_encoder_forward.1} parent=1 // pred_fallthru
      _
    %273 = vsyncpa [#allocation3], 1
    %274 = vsyncpa [#allocation6], 1
    %275 = vsyncpa [#allocation4], 1

</llo_original>
